<compile_context>
chip_gen: v7x
topology: tpu7x:2x2x1
jax: 0.10.0
libtpu: 0.0.40
codegen_flags: <defaults>
</compile_context>

<pallas_src>
import jax
import jax.numpy as jnp
from jax import lax
from jax.experimental import pallas as pl
from jax.experimental.pallas import tpu as pltpu


def _round_up(x, m):
    return (x + m - 1) // m * m


def _query_encoder_kernel(x_ref, w_ref, b_ref, o_ref):
    # x_ref: (TB, 768) f32  CLS embeddings for this micro-batch
    # w_ref: (768, D)  bf16 linear weight (transposed vs torch's (D, 768)),
    #                  VMEM-resident across the whole grid (constant index_map)
    # b_ref: (1, D)    f32  linear bias, also resident
    # o_ref: (TB, D)   f32  L2-normalized output
    x = x_ref[...].astype(jnp.bfloat16)              # cheap VPU cast -> bf16 MXU
    h = jnp.dot(x, w_ref[...], preferred_element_type=jnp.float32)
    h = h + b_ref[...]                               # f32 epilogue (v5e-safe)
    h = jnp.maximum(h, 0.0)                          # ReLU
    # F.normalize(x, p=2, dim=1, eps=1e-12): x / max(||x||_2, eps)
    # clamp sum-of-squares at eps^2 and use rsqrt (EUP slot) instead of sqrt+div
    sq = jnp.sum(h * h, axis=1, keepdims=True)
    inv = lax.rsqrt(jnp.maximum(sq, 1e-24))
    o_ref[...] = (h * inv).astype(o_ref.dtype)


def query_encoder_forward(last_hidden_state, w_t_bf16, b, *, tile_b=128):
    """last_hidden_state: (B, S, 768) f32; w_t_bf16: (768, D) bf16; b: (D,).

    Returns (B, D) f32 L2-normalized query embeddings.
    """
    B, S, H = last_hidden_state.shape
    D = w_t_bf16.shape[1]

    # CLS slice in the wrapper: XLA fuses it into the producer; avoids the
    # Squeezed-BlockSpec lowering risk flagged in review.
    cls = last_hidden_state[:, 0, :]                 # (B, 768) f32

    # Micro-batch tile: multiple of 8 sublanes, no larger than the padded batch.
    tile_b = max(8, min(tile_b, _round_up(B, 8)))
    tile_b = _round_up(tile_b, 8)
    Bp = _round_up(B, tile_b)
    if Bp != B:
        cls = jnp.pad(cls, ((0, Bp - B), (0, 0)))
    num_batches = Bp // tile_b

    b2 = b.reshape(1, D).astype(jnp.float32)

    cost = pl.CostEstimate(
        flops=2 * Bp * H * D,
        transcendentals=Bp,                          # one rsqrt per row
        bytes_accessed=(Bp * H * 4                   # CLS activations (f32 in)
                        + H * D * 2                  # bf16 weight (read once)
                        + D * 4                      # bias
                        + Bp * D * 4),               # f32 output
    )

    out = pl.pallas_call(
        _query_encoder_kernel,
        out_shape=jax.ShapeDtypeStruct((Bp, D), jnp.float32),
        grid_spec=pltpu.PrefetchScalarGridSpec(
            num_scalar_prefetch=0,
            grid=(num_batches,),
            in_specs=[
                # per-step micro-batch of CLS rows
                pl.BlockSpec((tile_b, H), lambda i: (i, 0)),
                # frozen weight + bias: constant index_map -> DMA'd once,
                # stays resident in VMEM across all grid steps
                pl.BlockSpec((H, D), lambda i: (0, 0)),
                pl.BlockSpec((1, D), lambda i: (0, 0)),
            ],
            out_specs=pl.BlockSpec((tile_b, D), lambda i: (i, 0)),
        ),
        compiler_params=pltpu.CompilerParams(
            dimension_semantics=("parallel",)),       # megacore split on v7x
        cost_estimate=cost,
    )(cls, w_t_bf16, b2)

    return out[:B]


def reference_forward(last_hidden_state, w_t_bf16, b):
    """Pure-JAX reference with the same bf16-quantized inputs, f32 accumulation."""
    cls_emb = last_hidden_state[:, 0, :].astype(jnp.bfloat16).astype(jnp.float32)
    w = w_t_bf16.astype(jnp.float32)
    x = jnp.dot(cls_emb, w, precision=lax.Precision.HIGHEST) + b
    x = jnp.maximum(x, 0.0)
    n = jnp.maximum(jnp.sqrt(jnp.sum(x * x, axis=1, keepdims=True)), 1e-12)
    return x / n


if __name__ == "__main__":
    key = jax.random.PRNGKey(0)
    k1, k2, k3 = jax.random.split(key, 3)

    batch, seq, hidden, query_embed_dim = 32, 8, 768, 128

    # Synthetic BERT last_hidden_state (frozen pretrained model's output).
    last_hidden_state = jax.random.normal(k1, (batch, seq, hidden), jnp.float32)

    # Linear(768, query_embed_dim) parameters; weight stored transposed and in
    # bf16 at rest (frozen downstream of a frozen model, so quantize once).
    w_t = jax.random.normal(k2, (hidden, query_embed_dim), jnp.float32) * 0.02
    w_t_bf16 = w_t.astype(jnp.bfloat16)
    b = jax.random.normal(k3, (query_embed_dim,), jnp.float32) * 0.02

    # tile_b=8 -> grid=(4,): exercises the multi-step resident-weight path
    # at small shapes (the wrapper defaults to larger tiles for real batches).
    out = query_encoder_forward(last_hidden_state, w_t_bf16, b, tile_b=8)
    out = jax.block_until_ready(out)

    ref = reference_forward(last_hidden_state, w_t_bf16, b)
    assert out.shape == (batch, query_embed_dim)
    assert jnp.allclose(out, ref, atol=1e-4, rtol=1e-4)
    # unit-norm rows (unless a row ReLU'd to all-zero)
    norms = jnp.sqrt(jnp.sum(out * out, axis=1))
    assert jnp.all((jnp.abs(norms - 1.0) < 1e-3) | (norms < 1e-6))

    # Single-step path (tile_b >= batch) must agree as well.
    out1 = jax.block_until_ready(
        query_encoder_forward(last_hidden_state, w_t_bf16, b, tile_b=128))
    assert jnp.allclose(out1, ref, atol=1e-4, rtol=1e-4)

    print("KERNEL_OK")
</pallas_src>

<mosaic_0001>
module attributes {stable_mosaic.version = 11 : i64} {
  func.func @_query_encoder_kernel(%arg0: i32, %arg1: memref<8x768xf32, #tpu.memory_space<vmem>>, %arg2: memref<768x128xbf16, #tpu.memory_space<vmem>>, %arg3: memref<1x128xf32, #tpu.memory_space<vmem>>, %arg4: memref<8x128xf32, #tpu.memory_space<vmem>>) attributes {dimension_semantics = [#tpu.dimension_semantics<parallel>], iteration_bounds = array<i64: 4>, scalar_prefetch = 0 : i64, scratch_operands = 0 : i64, tpu.core_type = #tpu.core_type<tc>, window_params = [{transform_indices = @transform_0, window_bounds = array<i64: 8, 768>}, {pipeline_mode = #tpu.pipeline_mode<synchronous>, transform_indices = @transform_1, window_bounds = array<i64: 768, 128>}, {pipeline_mode = #tpu.pipeline_mode<synchronous>, transform_indices = @transform_2, window_bounds = array<i64: 1, 128>}, {transform_indices = @transform_3, window_bounds = array<i64: 8, 128>}]} {
    %c0 = arith.constant 0 : index
    %c0_0 = arith.constant 0 : index
    %0 = vector.load %arg1[%c0, %c0_0] : memref<8x768xf32, #tpu.memory_space<vmem>>, vector<8x768xf32>
    %1 = arith.truncf %0 : vector<8x768xf32> to vector<8x768xbf16>
    %c0_1 = arith.constant 0 : index
    %c0_2 = arith.constant 0 : index
    %2 = vector.load %arg2[%c0_1, %c0_2] : memref<768x128xbf16, #tpu.memory_space<vmem>>, vector<768x128xbf16>
    %cst = arith.constant dense<0.000000e+00> : vector<8x128xf32>
    %3 = tpu.matmul %1, %2, %cst {dimension_numbers = #tpu.dot_dimension_numbers<[1], [0], [0], [1], [0, 0, 1, 1], [], []>} : vector<8x768xbf16>, vector<768x128xbf16>, vector<8x128xf32> -> vector<8x128xf32>
    %c0_3 = arith.constant 0 : index
    %c0_4 = arith.constant 0 : index
    %4 = vector.load %arg3[%c0_3, %c0_4] : memref<1x128xf32, #tpu.memory_space<vmem>>, vector<1x128xf32>
    %5 = vector.broadcast %4 : vector<1x128xf32> to vector<8x128xf32>
    %6 = arith.addf %3, %5 : vector<8x128xf32>
    %cst_5 = arith.constant 0.000000e+00 : f32
    %7 = vector.broadcast %cst_5 : f32 to vector<8x128xf32>
    %8 = arith.maximumf %6, %7 : vector<8x128xf32>
    %9 = arith.mulf %8, %8 : vector<8x128xf32>
    %cst_6 = arith.constant dense<0.000000e+00> : vector<8xf32>
    %10 = vector.multi_reduction <add>, %9, %cst_6 [1] : vector<8x128xf32> to vector<8xf32>
    %11 = vector.shape_cast %10 : vector<8xf32> to vector<8x1xf32>
    %cst_7 = arith.constant 1.000000e-24 : f32
    %12 = vector.broadcast %cst_7 : f32 to vector<8x1xf32>
    %13 = arith.maximumf %11, %12 : vector<8x1xf32>
    %14 = math.rsqrt %13 : vector<8x1xf32>
    %15 = vector.broadcast %14 : vector<8x1xf32> to vector<8x128xf32>
    %16 = arith.mulf %8, %15 : vector<8x128xf32>
    %c0_8 = arith.constant 0 : index
    %c0_9 = arith.constant 0 : index
    %17 = vector.load %arg4[%c0_8, %c0_9] : memref<8x128xf32, #tpu.memory_space<vmem>>, vector<8x128xf32>
    tpu.vector_store %arg4[%c0_8, %c0_9], %16 {strides = array<i32>} : memref<8x128xf32, #tpu.memory_space<vmem>>, vector<8x128xf32>,
    return
  }
  func.func @transform_0(%arg0: i32) -> (i32, i32) {
    %c0_i32 = arith.constant 0 : i32
    %c0_i32_0 = arith.constant 0 : i32
    return %arg0, %c0_i32 : i32, i32
  }
  func.func @transform_1(%arg0: i32) -> (i32, i32) {
    %c0_i32 = arith.constant 0 : i32
    %c0_i32_0 = arith.constant 0 : i32
    %c0_i32_1 = arith.constant 0 : i32
    return %c0_i32, %c0_i32_0 : i32, i32
  }
  func.func @transform_2(%arg0: i32) -> (i32, i32) {
    %c0_i32 = arith.constant 0 : i32
    %c0_i32_0 = arith.constant 0 : i32
    %c0_i32_1 = arith.constant 0 : i32
    return %c0_i32, %c0_i32_0 : i32, i32
  }
  func.func @transform_3(%arg0: i32) -> (i32, i32) {
    %c0_i32 = arith.constant 0 : i32
    %c0_i32_0 = arith.constant 0 : i32
    return %arg0, %c0_i32 : i32, i32
  }
}

</mosaic_0001>

<llo_original>
// kernel: tpu_custom_call.1
$region0: #{tpu_custom_call.1}
  #allocation0 [shape = 'u32[]', space=smem, size = 0x4, offset = 0x4, fixed_abs, tag = 'smem constant byte address 0x4 - core index']
  #allocation1 [shape = 'u32[144,128]{1,0:T(1,128)}', space=vmem, size = 0x12000, scoped, tag = 'internal scratch']
  %s0 = inlined_call_operand.hbm [shape: f32[32,768], index: 0, kind: input, shape index: {}]
  %s1 = inlined_call_operand.hbm [shape: bf16[768,128], index: 1, kind: input, shape index: {}]
  %s2 = inlined_call_operand.vmem [shape: f32[1,128], index: 2, kind: input, shape index: {}]
  %s3 = inlined_call_operand.hbm [shape: f32[32,128], index: 3, kind: output, shape index: {}]
  %s4 = sld [smem:[#allocation0]]
  $region53: #{tpu_custom_call.1} parent=0
    _
  %s6 = ssub.s32 1, %s4
  %s7 = scalar_select 0, %s6, %s4
  $region1: #{tpu_custom_call.1} parent=0
    #allocation2 [shape = 'u8[49152]{0}', space=vmem, size = 0xc000, scoped, tag = 'input window, operand 0']
    #allocation3 [shape = 's32[2]{0}', space=sflag, size = 0x8, scoped, tag = 'scoped memory for tpu_custom_call.1']
    #allocation4 [shape = 's32[2]{0}', space=sflag, size = 0x8, scoped, tag = 'scoped memory for tpu_custom_call.1']
    #allocation5 [shape = 'u8[196608]{0}', space=vmem, size = 0x30000, scoped, tag = 'input window, operand 1, single buffered']
    #allocation6 [shape = 's32[1]{0}', space=sflag, size = 0x4, scoped, tag = 'scoped memory for tpu_custom_call.1']
    #allocation7 [shape = 'u8[8192]{0}', space=vmem, size = 0x2000, scoped, tag = 'output window, operand 0']
    %8 = vsyncpa [#allocation3], 0
    %s9 = scalar_lea.sflag [#allocation3], 1
    %10 = vsyncpa %s9, 0
    %11 = vsyncpa [#allocation6], 0
    %12 = vsyncpa [#allocation4], 0
    %s13 = scalar_lea.sflag [#allocation4], 1
    %14 = vsyncpa %s13, 0
    loop: start=0, step=1, limit=6
    $region2: #{tpu_custom_call.1} parent=1 // loop_pre_header
      _
    $region3: #{tpu_custom_call.1} parent=1 // loop_header
      %s16 = sphi 0, %s20
      %p17 = scmp.ge.s32.totalorder %s16, 6
      %s26 = sphi 0, %s28
      %s29 = sphi 0, %s26
      %s30 = sphi 0, %s29
      %s46 = sphi 0, %s30
      %s50 = sphi 0, %s50
      %s52 = sphi 0, %s50
      %s53 = sphi 0, %s52
      %s67 = sphi 0, %s53
      %s71 = sphi 0, %s71
      %s73 = sphi 0, %s71
      %s74 = sphi 0, %s73
      %s88 = sphi 0, %s74
      %s94 = sphi 0, %s96
      %s97 = sphi 0, %s94
      %s98 = sphi 0, %s97
      %s114 = sphi 0, %s98
    $region4: #{tpu_custom_call.1} parent=1 // loop_header_branch
      %19 = sbr.rel (%p17) target = $region8
    $region5: #{tpu_custom_call.1} parent=1 // loop_body
      %s21 = ssub.s32 %s16, 1
      %s22 = ssub.s32 %s16, 2
      %s23 = sadd.s32 %s16, 1
      %s24 = ssub.s32 %s16, %s23
      %p25 = scmp.eq.s32.totalorder %s24, 0
      %s27 = sadd.s32 %s26, 1
      %s28 = scalar_select %p25, %s26, %s27
      %p31 = pneg %p25
      %p32 = scmp.eq.s32.totalorder %s16, 3
      %p33 = por %p31, %p32
      %p34 = scmp.ne.s32.totalorder %s26, %s29
      %p35 = scmp.eq.s32.totalorder %s16, 0
      %p36 = por %p34, %p35
      %p37 = scmp.ne.s32.totalorder %s26, %s29
      %p38 = scmp.eq.s32.totalorder %s21, 3
      %p39 = por %p37, %p38
      %p40 = scmp.ne.s32.totalorder %s29, %s30
      %p41 = scmp.eq.s32.totalorder %s21, 0
      %p42 = por %p40, %p41
      %p43 = scmp.ne.s32.totalorder %s29, %s30
      %p44 = scmp.eq.s32.totalorder %s22, 3
      %p45 = por %p43, %p44
      %p47 = scmp.ne.s32.totalorder %s30, %s46
      %p48 = scmp.eq.s32.totalorder %s22, 0
      %p49 = por %p47, %p48
      %s51 = sadd.s32 %s50, 1
      %p54 = scmp.eq.s32.totalorder %s16, 3
      %p55 = scmp.ne.s32.totalorder %s50, %s52
      %p56 = scmp.eq.s32.totalorder %s16, 0
      %p57 = por %p55, %p56
      %p58 = scmp.ne.s32.totalorder %s50, %s52
      %p59 = scmp.eq.s32.totalorder %s21, 3
      %p60 = por %p58, %p59
      %p61 = scmp.ne.s32.totalorder %s52, %s53
      %p62 = scmp.eq.s32.totalorder %s21, 0
      %p63 = por %p61, %p62
      %p64 = scmp.ne.s32.totalorder %s52, %s53
      %p65 = scmp.eq.s32.totalorder %s22, 3
      %p66 = por %p64, %p65
      %p68 = scmp.ne.s32.totalorder %s53, %s67
      %p69 = scmp.eq.s32.totalorder %s22, 0
      %p70 = por %p68, %p69
      %s72 = sadd.s32 %s71, 1
      %p75 = scmp.eq.s32.totalorder %s16, 3
      %p76 = scmp.ne.s32.totalorder %s71, %s73
      %p77 = scmp.eq.s32.totalorder %s16, 0
      %p78 = por %p76, %p77
      %p79 = scmp.ne.s32.totalorder %s71, %s73
      %p80 = scmp.eq.s32.totalorder %s21, 3
      %p81 = por %p79, %p80
      %p82 = scmp.ne.s32.totalorder %s73, %s74
      %p83 = scmp.eq.s32.totalorder %s21, 0
      %p84 = por %p82, %p83
      %p85 = scmp.ne.s32.totalorder %s73, %s74
      %p86 = scmp.eq.s32.totalorder %s22, 3
      %p87 = por %p85, %p86
      %p89 = scmp.ne.s32.totalorder %s74, %s88
      %p90 = scmp.eq.s32.totalorder %s22, 0
      %p91 = por %p89, %p90
      %s92 = ssub.s32 %s16, %s23
      %p93 = scmp.eq.s32.totalorder %s92, 0
      %s95 = sadd.s32 %s94, 1
      %s96 = scalar_select %p93, %s94, %s95
      %p99 = pneg %p93
      %p100 = scmp.eq.s32.totalorder %s16, 3
      %p101 = por %p99, %p100
      %p102 = scmp.ne.s32.totalorder %s94, %s97
      %p103 = scmp.eq.s32.totalorder %s16, 0
      %p104 = por %p102, %p103
      %p105 = scmp.ne.s32.totalorder %s94, %s97
      %p106 = scmp.eq.s32.totalorder %s21, 3
      %p107 = por %p105, %p106
      %p108 = scmp.ne.s32.totalorder %s97, %s98
      %p109 = scmp.eq.s32.totalorder %s21, 0
      %p110 = por %p108, %p109
      %p111 = scmp.ne.s32.totalorder %s97, %s98
      %p112 = scmp.eq.s32.totalorder %s22, 3
      %p113 = por %p111, %p112
      %p115 = scmp.ne.s32.totalorder %s98, %s114
      %p116 = scmp.eq.s32.totalorder %s22, 0
      %p117 = por %p115, %p116
      %p118 = scmp.le.s32.totalorder 1, %s16
      %p119 = scmp.lt.s32.totalorder %s16, 5
      %p120 = pnand %p118, %p119
      %p121 = pneg %p120
      // Predicated region
      $region9: #{tpu_custom_call.1} parent=5 // pred_check
        _
      $region10: #{tpu_custom_call.1} parent=5 // pred_check_branch
        %123 = sbr.rel (%p120) target = $region12
      $region11: #{tpu_custom_call.1} parent=5 // pred_region
        %s124 = ssub.s32 %s16, 1
        // Predicated region
        $region13: #{tpu_custom_call.1} parent=11 // pred_check
          %p125 = pneg %p63
        $region14: #{tpu_custom_call.1} parent=11 // pred_check_branch
          %127 = sbr.rel (%p125) target = $region16
        $region15: #{tpu_custom_call.1} parent=11 // pred_region
          %s129 = ssub.s32 6144, 6144
          %130 = vsyncadd [#allocation6], %s129
          %s131 = sshll.u32 [#allocation5], 4
          %s132 = int_to_ptr.vmem [resolvable:$true] %s131
          %137 = dma.hbm_to_vmem [thread:$0]  %s1, 6144, %s132, [#allocation6], 64, 64, 4
        $region16: #{tpu_custom_call.1} parent=11 // pred_fallthru
          _
        // Predicated region
        $region17: #{tpu_custom_call.1} parent=11 // pred_check
          %p138 = pneg %p84
        $region18: #{tpu_custom_call.1} parent=11 // pred_check_branch
          %140 = sbr.rel (%p138) target = $region20
        $region19: #{tpu_custom_call.1} parent=11 // pred_region
          _
        $region20: #{tpu_custom_call.1} parent=11 // pred_fallthru
          _
      $region12: #{tpu_custom_call.1} parent=5 // pred_fallthru
        _
      %p141 = scmp.lt.s32.totalorder %s16, 4
      // Predicated region
      $region21: #{tpu_custom_call.1} parent=5 // pred_check
        %p142 = pneg %p141
      $region22: #{tpu_custom_call.1} parent=5 // pred_check_branch
        %144 = sbr.rel (%p142) target = $region24
      $region23: #{tpu_custom_call.1} parent=5 // pred_region
        // Predicated region
        $region25: #{tpu_custom_call.1} parent=23 // pred_check
          %p145 = pneg %p36
        $region26: #{tpu_custom_call.1} parent=23 // pred_check_branch
          %147 = sbr.rel (%p145) target = $region28
        $region27: #{tpu_custom_call.1} parent=23 // pred_region
          %s148 = sand.u32 %s26, 1
          %s149 = scalar_lea.sflag [#allocation3], %s148
          %s150 = sand.u32 %s26, 1
          %s151 = smul.addr %s150, 48
          %s152 = scalar_lea.vmem [#allocation2], %s151
          %s154 = ssub.s32 768, 768
          %155 = vsyncadd %s149, %s154
          %s156 = smul.addr %s16, 6
          %s157 = smul.addr %s156, 128
          %s158 = scalar_lea.hbm %s0, %s157
          %s160 = sshll.u32 %s152, 4
          %s161 = int_to_ptr.vmem [resolvable:$true] %s160
          %163 = dma.hbm_to_vmem [thread:$0]  %s158, 768, %s161, %s149
        $region28: #{tpu_custom_call.1} parent=23 // pred_fallthru
          _
      $region24: #{tpu_custom_call.1} parent=5 // pred_fallthru
        _
      %p164 = scmp.le.s32.totalorder 1, %s16
      %p165 = scmp.lt.s32.totalorder %s16, 5
      %p166 = pnand %p164, %p165
      %p167 = pneg %p166
      // Predicated region
      $region29: #{tpu_custom_call.1} parent=5 // pred_check
        _
      $region30: #{tpu_custom_call.1} parent=5 // pred_check_branch
        %169 = sbr.rel (%p166) target = $region32
      $region31: #{tpu_custom_call.1} parent=5 // pred_region
        %s170 = ssub.s32 %s16, 1
        %s171 = sand.u32 %s29, 1
        %s172 = scalar_lea.sflag [#allocation3], %s171
        %s173 = sand.u32 %s29, 1
        %s174 = smul.addr %s173, 48
        %s175 = scalar_lea.vmem [#allocation2], %s174
        // Predicated region
        $region33: #{tpu_custom_call.1} parent=31 // pred_check
          %p176 = pneg %p42
        $region34: #{tpu_custom_call.1} parent=31 // pred_check_branch
          %178 = sbr.rel (%p176) target = $region36
        $region35: #{tpu_custom_call.1} parent=31 // pred_region
          %179 = dma.done %s172, 768
        $region36: #{tpu_custom_call.1} parent=31 // pred_fallthru
          _
        // Predicated region
        $region37: #{tpu_custom_call.1} parent=31 // pred_check
          %p180 = pneg %p63
        $region38: #{tpu_custom_call.1} parent=31 // pred_check_branch
          %182 = sbr.rel (%p180) target = $region40
        $region39: #{tpu_custom_call.1} parent=31 // pred_region
          %183 = dma.done [#allocation6], 6144
        $region40: #{tpu_custom_call.1} parent=31 // pred_fallthru
          _
        %s184 = sand.u32 %s29, 1
        %s185 = scalar_lea.sflag [#allocation3], %s184
        %s186 = sand.u32 %s29, 1
        %s187 = smul.addr %s186, 48
        %s188 = scalar_lea.vmem [#allocation2], %s187
        %p189 = pneg %p42
        %p190 = pneg %p39
        %p191 = pneg %p63
        %p192 = pneg %p60
        %p193 = pneg %p84
        %p194 = pneg %p81
        %p195 = pneg %p110
        %p196 = pneg %p107
        %s197 = sand.u32 %s97, 1
        %s198 = scalar_lea.sflag [#allocation4], %s197
        %s199 = sand.u32 %s97, 1
        %s200 = smul.addr %s199, 8
        %s201 = scalar_lea.vmem [#allocation7], %s200
        %v203 = vld [vmem:[%s175] sm:$0xff]
        %v204 = vld [vmem:[%s175 + $0x8] sm:$0xff]
        %v205 = vld [vmem:[%s175 + $0x10] sm:$0xff]
        %v206 = vld [vmem:[%s175 + $0x18] sm:$0xff]
        %v207 = vld [vmem:[%s175 + $0x20] sm:$0xff]
        %v208 = vld [vmem:[%s175 + $0x28] sm:$0xff]
        %v209 = vpack.c.bf16 %v203, %v203
        %v210 = vpack.c.bf16 %v204, %v204
        %v211 = vpack.c.bf16 %v205, %v205
        %v212 = vpack.c.bf16 %v206, %v206
        %v213 = vpack.c.bf16 %v207, %v207
        %v214 = vpack.c.bf16 %v208, %v208
        %v215 = vld [vmem:[#allocation5] sm:$0xf]
        %v216 = vld [vmem:[#allocation5 + $0x4] sm:$0xf]
        %v217 = vld [vmem:[#allocation5 + $0x8] sm:$0xf]
        %v218 = vld [vmem:[#allocation5 + $0xc] sm:$0xf]
        %v219 = vld [vmem:[#allocation5 + $0x10] sm:$0xf]
        %v220 = vld [vmem:[#allocation5 + $0x14] sm:$0xf]
        %v221 = vld [vmem:[#allocation5 + $0x18] sm:$0xf]
        %v222 = vld [vmem:[#allocation5 + $0x1c] sm:$0xf]
        %v223 = vld [vmem:[#allocation5 + $0x20] sm:$0xf]
        %v224 = vld [vmem:[#allocation5 + $0x24] sm:$0xf]
        %v225 = vld [vmem:[#allocation5 + $0x28] sm:$0xf]
        %v226 = vld [vmem:[#allocation5 + $0x2c] sm:$0xf]
        %v227 = vld [vmem:[#allocation5 + $0x30] sm:$0xf]
        %v228 = vld [vmem:[#allocation5 + $0x34] sm:$0xf]
        %v229 = vld [vmem:[#allocation5 + $0x38] sm:$0xf]
        %v230 = vld [vmem:[#allocation5 + $0x3c] sm:$0xf]
        %v231 = vld [vmem:[#allocation5 + $0x40] sm:$0xf]
        %v232 = vld [vmem:[#allocation5 + $0x44] sm:$0xf]
        %v233 = vld [vmem:[#allocation5 + $0x48] sm:$0xf]
        %v234 = vld [vmem:[#allocation5 + $0x4c] sm:$0xf]
        %v235 = vld [vmem:[#allocation5 + $0x50] sm:$0xf]
        %v236 = vld [vmem:[#allocation5 + $0x54] sm:$0xf]
        %v237 = vld [vmem:[#allocation5 + $0x58] sm:$0xf]
        %v238 = vld [vmem:[#allocation5 + $0x5c] sm:$0xf]
        %v239 = vld [vmem:[#allocation5 + $0x60] sm:$0xf]
        %v240 = vld [vmem:[#allocation5 + $0x64] sm:$0xf]
        %v241 = vld [vmem:[#allocation5 + $0x68] sm:$0xf]
        %v242 = vld [vmem:[#allocation5 + $0x6c] sm:$0xf]
        %v243 = vld [vmem:[#allocation5 + $0x70] sm:$0xf]
        %v244 = vld [vmem:[#allocation5 + $0x74] sm:$0xf]
        %v245 = vld [vmem:[#allocation5 + $0x78] sm:$0xf]
        %v246 = vld [vmem:[#allocation5 + $0x7c] sm:$0xf]
        %v247 = vld [vmem:[#allocation5 + $0x80] sm:$0xf]
        %v248 = vld [vmem:[#allocation5 + $0x84] sm:$0xf]
        %v249 = vld [vmem:[#allocation5 + $0x88] sm:$0xf]
        %v250 = vld [vmem:[#allocation5 + $0x8c] sm:$0xf]
        %v251 = vld [vmem:[#allocation5 + $0x90] sm:$0xf]
        %v252 = vld [vmem:[#allocation5 + $0x94] sm:$0xf]
        %v253 = vld [vmem:[#allocation5 + $0x98] sm:$0xf]
        %v254 = vld [vmem:[#allocation5 + $0x9c] sm:$0xf]
        %v255 = vld [vmem:[#allocation5 + $0xa0] sm:$0xf]
        %v256 = vld [vmem:[#allocation5 + $0xa4] sm:$0xf]
        %v257 = vld [vmem:[#allocation5 + $0xa8] sm:$0xf]
        %v258 = vld [vmem:[#allocation5 + $0xac] sm:$0xf]
        %v259 = vld [vmem:[#allocation5 + $0xb0] sm:$0xf]
        %v260 = vld [vmem:[#allocation5 + $0xb4] sm:$0xf]
        %v261 = vld [vmem:[#allocation5 + $0xb8] sm:$0xf]
        %v262 = vld [vmem:[#allocation5 + $0xbc] sm:$0xf]
        %v263 = vld [vmem:[#allocation5 + $0xc0] sm:$0xf]
        %v264 = vld [vmem:[#allocation5 + $0xc4] sm:$0xf]
        %v265 = vld [vmem:[#allocation5 + $0xc8] sm:$0xf]
        %v266 = vld [vmem:[#allocation5 + $0xcc] sm:$0xf]
        %v267 = vld [vmem:[#allocation5 + $0xd0] sm:$0xf]
        %v268 = vld [vmem:[#allocation5 + $0xd4] sm:$0xf]
        %v269 = vld [vmem:[#allocation5 + $0xd8] sm:$0xf]
        %v270 = vld [vmem:[#allocation5 + $0xdc] sm:$0xf]
        %v271 = vld [vmem:[#allocation5 + $0xe0] sm:$0xf]
        %v272 = vld [vmem:[#allocation5 + $0xe4] sm:$0xf]
        %v273 = vld [vmem:[#allocation5 + $0xe8] sm:$0xf]
        %v274 = vld [vmem:[#allocation5 + $0xec] sm:$0xf]
        %v275 = vld [vmem:[#allocation5 + $0xf0] sm:$0xf]
        %v276 = vld [vmem:[#allocation5 + $0xf4] sm:$0xf]
        %v277 = vld [vmem:[#allocation5 + $0xf8] sm:$0xf]
        %v278 = vld [vmem:[#allocation5 + $0xfc] sm:$0xf]
        %v279 = vld [vmem:[#allocation5 + $0x100] sm:$0xf]
        %v280 = vld [vmem:[#allocation5 + $0x104] sm:$0xf]
        %v281 = vld [vmem:[#allocation5 + $0x108] sm:$0xf]
        %v282 = vld [vmem:[#allocation5 + $0x10c] sm:$0xf]
        %v283 = vld [vmem:[#allocation5 + $0x110] sm:$0xf]
        %v284 = vld [vmem:[#allocation5 + $0x114] sm:$0xf]
        %v285 = vld [vmem:[#allocation5 + $0x118] sm:$0xf]
        %v286 = vld [vmem:[#allocation5 + $0x11c] sm:$0xf]
        %v287 = vld [vmem:[#allocation5 + $0x120] sm:$0xf]
        %v288 = vld [vmem:[#allocation5 + $0x124] sm:$0xf]
        %v289 = vld [vmem:[#allocation5 + $0x128] sm:$0xf]
        %v290 = vld [vmem:[#allocation5 + $0x12c] sm:$0xf]
        %v291 = vld [vmem:[#allocation5 + $0x130] sm:$0xf]
        %v292 = vld [vmem:[#allocation5 + $0x134] sm:$0xf]
        %v293 = vld [vmem:[#allocation5 + $0x138] sm:$0xf]
        %v294 = vld [vmem:[#allocation5 + $0x13c] sm:$0xf]
        %v295 = vld [vmem:[#allocation5 + $0x140] sm:$0xf]
        %v296 = vld [vmem:[#allocation5 + $0x144] sm:$0xf]
        %v297 = vld [vmem:[#allocation5 + $0x148] sm:$0xf]
        %v298 = vld [vmem:[#allocation5 + $0x14c] sm:$0xf]
        %v299 = vld [vmem:[#allocation5 + $0x150] sm:$0xf]
        %v300 = vld [vmem:[#allocation5 + $0x154] sm:$0xf]
        %v301 = vld [vmem:[#allocation5 + $0x158] sm:$0xf]
        %v302 = vld [vmem:[#allocation5 + $0x15c] sm:$0xf]
        %v303 = vld [vmem:[#allocation5 + $0x160] sm:$0xf]
        %v304 = vld [vmem:[#allocation5 + $0x164] sm:$0xf]
        %v305 = vld [vmem:[#allocation5 + $0x168] sm:$0xf]
        %v306 = vld [vmem:[#allocation5 + $0x16c] sm:$0xf]
        %v307 = vld [vmem:[#allocation5 + $0x170] sm:$0xf]
        %v308 = vld [vmem:[#allocation5 + $0x174] sm:$0xf]
        %v309 = vld [vmem:[#allocation5 + $0x178] sm:$0xf]
        %v310 = vld [vmem:[#allocation5 + $0x17c] sm:$0xf]
        %v311 = vld [vmem:[%s2] sm:$0x1]
        %v313 = vlaneseq
        %v314 = vshrl.u32 %v313, 7
        %v315 = vsub.s32 0, %v314
        %v316 = vrot.slane %v311, %v315
        %v414 = vunpack.c.l.b16 %v215
        %v415 = vunpack.c.l.b16 %v216
        %v416 = vunpack.c.l.b16 %v217
        %v417 = vunpack.c.l.b16 %v218
        %v418 = vunpack.c.l.b16 %v219
        %v419 = vunpack.c.l.b16 %v220
        %v420 = vunpack.c.l.b16 %v221
        %v421 = vunpack.c.l.b16 %v222
        %v422 = vunpack.c.l.b16 %v223
        %v423 = vunpack.c.l.b16 %v224
        %v424 = vunpack.c.l.b16 %v225
        %v425 = vunpack.c.l.b16 %v226
        %v426 = vunpack.c.l.b16 %v227
        %v427 = vunpack.c.l.b16 %v228
        %v428 = vunpack.c.l.b16 %v229
        %v429 = vunpack.c.l.b16 %v230
        %v430 = vunpack.c.l.b16 %v231
        %v431 = vunpack.c.l.b16 %v232
        %v432 = vunpack.c.l.b16 %v233
        %v433 = vunpack.c.l.b16 %v234
        %v434 = vunpack.c.l.b16 %v235
        %v435 = vunpack.c.l.b16 %v236
        %v436 = vunpack.c.l.b16 %v237
        %v437 = vunpack.c.l.b16 %v238
        %v438 = vunpack.c.l.b16 %v239
        %v439 = vunpack.c.l.b16 %v240
        %v440 = vunpack.c.l.b16 %v241
        %v441 = vunpack.c.l.b16 %v242
        %v442 = vunpack.c.l.b16 %v243
        %v443 = vunpack.c.l.b16 %v244
        %v444 = vunpack.c.l.b16 %v245
        %v445 = vunpack.c.l.b16 %v246
        %v446 = vunpack.c.l.b16 %v247
        %v447 = vunpack.c.l.b16 %v248
        %v448 = vunpack.c.l.b16 %v249
        %v449 = vunpack.c.l.b16 %v250
        %v450 = vunpack.c.l.b16 %v251
        %v451 = vunpack.c.l.b16 %v252
        %v452 = vunpack.c.l.b16 %v253
        %v453 = vunpack.c.l.b16 %v254
        %v454 = vunpack.c.l.b16 %v255
        %v455 = vunpack.c.l.b16 %v256
        %v456 = vunpack.c.l.b16 %v257
        %v457 = vunpack.c.l.b16 %v258
        %v458 = vunpack.c.l.b16 %v259
        %v459 = vunpack.c.l.b16 %v260
        %v460 = vunpack.c.l.b16 %v261
        %v461 = vunpack.c.l.b16 %v262
        %v462 = vunpack.c.l.b16 %v263
        %v463 = vunpack.c.l.b16 %v264
        %v464 = vunpack.c.l.b16 %v265
        %v465 = vunpack.c.l.b16 %v266
        %v466 = vunpack.c.l.b16 %v267
        %v467 = vunpack.c.l.b16 %v268
        %v468 = vunpack.c.l.b16 %v269
        %v469 = vunpack.c.l.b16 %v270
        %v470 = vunpack.c.l.b16 %v271
        %v471 = vunpack.c.l.b16 %v272
        %v472 = vunpack.c.l.b16 %v273
        %v473 = vunpack.c.l.b16 %v274
        %v474 = vunpack.c.l.b16 %v275
        %v475 = vunpack.c.l.b16 %v276
        %v476 = vunpack.c.l.b16 %v277
        %v477 = vunpack.c.l.b16 %v278
        %v478 = vunpack.c.l.b16 %v279
        %v479 = vunpack.c.l.b16 %v280
        %v480 = vunpack.c.l.b16 %v281
        %v481 = vunpack.c.l.b16 %v282
        %v482 = vunpack.c.l.b16 %v283
        %v483 = vunpack.c.l.b16 %v284
        %v484 = vunpack.c.l.b16 %v285
        %v485 = vunpack.c.l.b16 %v286
        %v486 = vunpack.c.l.b16 %v287
        %v487 = vunpack.c.l.b16 %v288
        %v488 = vunpack.c.l.b16 %v289
        %v489 = vunpack.c.l.b16 %v290
        %v490 = vunpack.c.l.b16 %v291
        %v491 = vunpack.c.l.b16 %v292
        %v492 = vunpack.c.l.b16 %v293
        %v493 = vunpack.c.l.b16 %v294
        %v494 = vunpack.c.l.b16 %v295
        %v495 = vunpack.c.l.b16 %v296
        %v496 = vunpack.c.l.b16 %v297
        %v497 = vunpack.c.l.b16 %v298
        %v498 = vunpack.c.l.b16 %v299
        %v499 = vunpack.c.l.b16 %v300
        %v500 = vunpack.c.l.b16 %v301
        %v501 = vunpack.c.l.b16 %v302
        %v502 = vunpack.c.l.b16 %v303
        %v503 = vunpack.c.l.b16 %v304
        %v504 = vunpack.c.l.b16 %v305
        %v505 = vunpack.c.l.b16 %v306
        %v506 = vunpack.c.l.b16 %v307
        %v507 = vunpack.c.l.b16 %v308
        %v508 = vunpack.c.l.b16 %v309
        %v509 = vunpack.c.l.b16 %v310
        %v510 = vpack.c.b16 %v415, %v414
        %v511 = vpack.c.b16 %v417, %v416
        %v512 = vpack.c.b16 %v419, %v418
        %v513 = vpack.c.b16 %v421, %v420
        %v514 = vpack.c.b16 %v423, %v422
        %v515 = vpack.c.b16 %v425, %v424
        %v516 = vpack.c.b16 %v427, %v426
        %v517 = vpack.c.b16 %v429, %v428
        %v518 = vpack.c.b16 %v431, %v430
        %v519 = vpack.c.b16 %v433, %v432
        %v520 = vpack.c.b16 %v435, %v434
        %v521 = vpack.c.b16 %v437, %v436
        %v522 = vpack.c.b16 %v439, %v438
        %v523 = vpack.c.b16 %v441, %v440
        %v524 = vpack.c.b16 %v443, %v442
        %v525 = vpack.c.b16 %v445, %v444
        %v526 = vpack.c.b16 %v447, %v446
        %v527 = vpack.c.b16 %v449, %v448
        %v528 = vpack.c.b16 %v451, %v450
        %v529 = vpack.c.b16 %v453, %v452
        %v530 = vpack.c.b16 %v455, %v454
        %v531 = vpack.c.b16 %v457, %v456
        %v532 = vpack.c.b16 %v459, %v458
        %v533 = vpack.c.b16 %v461, %v460
        %v534 = vpack.c.b16 %v463, %v462
        %v535 = vpack.c.b16 %v465, %v464
        %v536 = vpack.c.b16 %v467, %v466
        %v537 = vpack.c.b16 %v469, %v468
        %v538 = vpack.c.b16 %v471, %v470
        %v539 = vpack.c.b16 %v473, %v472
        %v540 = vpack.c.b16 %v475, %v474
        %v541 = vpack.c.b16 %v477, %v476
        %v542 = vpack.c.b16 %v479, %v478
        %v543 = vpack.c.b16 %v481, %v480
        %v544 = vpack.c.b16 %v483, %v482
        %v545 = vpack.c.b16 %v485, %v484
        %v546 = vpack.c.b16 %v487, %v486
        %v547 = vpack.c.b16 %v489, %v488
        %v548 = vpack.c.b16 %v491, %v490
        %v549 = vpack.c.b16 %v493, %v492
        %v550 = vpack.c.b16 %v495, %v494
        %v551 = vpack.c.b16 %v497, %v496
        %v552 = vpack.c.b16 %v499, %v498
        %v553 = vpack.c.b16 %v501, %v500
        %v554 = vpack.c.b16 %v503, %v502
        %v555 = vpack.c.b16 %v505, %v504
        %v556 = vpack.c.b16 %v507, %v506
        %v557 = vpack.c.b16 %v509, %v508
        %606 = vmatprep.subr.bf16.mxu0 0
        %607 = vmatpush1.bf16.msra.mxu0 %v510
        %608 = vmatprep.subr.bf16.mxu0 0
        %609 = vmatpush1.bf16.msra.mxu0 %v511
        %610 = vmatprep.subr.bf16.mxu0 0
        %611 = vmatpush1.bf16.msra.mxu0 %v512
        %612 = vmatprep.subr.bf16.mxu0 0
        %613 = vmatpush1.bf16.msra.mxu0 %v513
        %614 = vmatprep.subr.bf16.mxu0 0
        %615 = vmatpush1.bf16.msra.mxu0 %v514
        %616 = vmatprep.subr.bf16.mxu0 0
        %617 = vmatpush1.bf16.msra.mxu0 %v515
        %618 = vmatprep.subr.bf16.mxu0 0
        %619 = vmatpush1.bf16.msra.mxu0 %v516
        %620 = vmatprep.subr.bf16.mxu0 0
        %621 = vmatpush1.bf16.msra.mxu0 %v517
        %622 = vmatprep.subr.bf16.mxu0 0
        %623 = vmatpush1.bf16.msra.mxu0 %v518
        %624 = vmatprep.subr.bf16.mxu0 0
        %625 = vmatpush1.bf16.msra.mxu0 %v519
        %626 = vmatprep.subr.bf16.mxu0 0
        %627 = vmatpush1.bf16.msra.mxu0 %v520
        %628 = vmatprep.subr.bf16.mxu0 0
        %629 = vmatpush1.bf16.msra.mxu0 %v521
        %630 = vmatprep.subr.bf16.mxu0 0
        %631 = vmatpush1.bf16.msra.mxu0 %v522
        %632 = vmatprep.subr.bf16.mxu0 0
        %633 = vmatpush1.bf16.msra.mxu0 %v523
        %634 = vmatprep.subr.bf16.mxu0 0
        %635 = vmatpush1.bf16.msra.mxu0 %v524
        %636 = vmatprep.subr.bf16.mxu0 0
        %637 = vmatpush1.bf16.msra.mxu0 %v525
        %638 = vmatprep.mubr.bf16.mxu0 %v210
        %639 = vmatmul.mubr.bf16.gmra.mrb[0].mxu0 %v209
        %v640 = vpop.f32.mrb[0].mxu0
        %v641 = vadd.f32 %v316, %v640
        %v642 = vpop.f32.mrb[0].mxu0
        %v643 = vpop.f32.mrb[0].mxu0
        %v644 = vpop.f32.mrb[0].mxu0
        %645 = vdwg.mxu0
        %646 = vmatprep.subr.bf16.mxu0 0
        %647 = vmatpush1.bf16.msra.mxu0 %v526
        %648 = vmatprep.subr.bf16.mxu0 0
        %649 = vmatpush1.bf16.msra.mxu0 %v527
        %650 = vmatprep.subr.bf16.mxu0 0
        %651 = vmatpush1.bf16.msra.mxu0 %v528
        %652 = vmatprep.subr.bf16.mxu0 0
        %653 = vmatpush1.bf16.msra.mxu0 %v529
        %654 = vmatprep.subr.bf16.mxu0 0
        %655 = vmatpush1.bf16.msra.mxu0 %v530
        %656 = vmatprep.subr.bf16.mxu0 0
        %657 = vmatpush1.bf16.msra.mxu0 %v531
        %658 = vmatprep.subr.bf16.mxu0 0
        %659 = vmatpush1.bf16.msra.mxu0 %v532
        %660 = vmatprep.subr.bf16.mxu0 0
        %661 = vmatpush1.bf16.msra.mxu0 %v533
        %662 = vmatprep.subr.bf16.mxu0 0
        %663 = vmatpush1.bf16.msra.mxu0 %v534
        %664 = vmatprep.subr.bf16.mxu0 0
        %665 = vmatpush1.bf16.msra.mxu0 %v535
        %666 = vmatprep.subr.bf16.mxu0 0
        %667 = vmatpush1.bf16.msra.mxu0 %v536
        %668 = vmatprep.subr.bf16.mxu0 0
        %669 = vmatpush1.bf16.msra.mxu0 %v537
        %670 = vmatprep.subr.bf16.mxu0 0
        %671 = vmatpush1.bf16.msra.mxu0 %v538
        %672 = vmatprep.subr.bf16.mxu0 0
        %673 = vmatpush1.bf16.msra.mxu0 %v539
        %674 = vmatprep.subr.bf16.mxu0 0
        %675 = vmatpush1.bf16.msra.mxu0 %v540
        %676 = vmatprep.subr.bf16.mxu0 0
        %677 = vmatpush1.bf16.msra.mxu0 %v541
        %678 = vmatprep.mubr.bf16.mxu0 %v212
        %679 = vmatmul.mubr.bf16.gmra.mrb[0].mxu0 %v211
        %v680 = vpop.f32.mrb[0].mxu0
        %v681 = vadd.f32 %v641, %v680
        %v682 = vpop.f32.mrb[0].mxu0
        %v683 = vpop.f32.mrb[0].mxu0
        %v684 = vpop.f32.mrb[0].mxu0
        %685 = vdwg.mxu0
        %686 = vmatprep.subr.bf16.mxu0 0
        %687 = vmatpush1.bf16.msra.mxu0 %v542
        %688 = vmatprep.subr.bf16.mxu0 0
        %689 = vmatpush1.bf16.msra.mxu0 %v543
        %690 = vmatprep.subr.bf16.mxu0 0
        %691 = vmatpush1.bf16.msra.mxu0 %v544
        %692 = vmatprep.subr.bf16.mxu0 0
        %693 = vmatpush1.bf16.msra.mxu0 %v545
        %694 = vmatprep.subr.bf16.mxu0 0
        %695 = vmatpush1.bf16.msra.mxu0 %v546
        %696 = vmatprep.subr.bf16.mxu0 0
        %697 = vmatpush1.bf16.msra.mxu0 %v547
        %698 = vmatprep.subr.bf16.mxu0 0
        %699 = vmatpush1.bf16.msra.mxu0 %v548
        %700 = vmatprep.subr.bf16.mxu0 0
        %701 = vmatpush1.bf16.msra.mxu0 %v549
        %702 = vmatprep.subr.bf16.mxu0 0
        %703 = vmatpush1.bf16.msra.mxu0 %v550
        %704 = vmatprep.subr.bf16.mxu0 0
        %705 = vmatpush1.bf16.msra.mxu0 %v551
        %706 = vmatprep.subr.bf16.mxu0 0
        %707 = vmatpush1.bf16.msra.mxu0 %v552
        %708 = vmatprep.subr.bf16.mxu0 0
        %709 = vmatpush1.bf16.msra.mxu0 %v553
        %710 = vmatprep.subr.bf16.mxu0 0
        %711 = vmatpush1.bf16.msra.mxu0 %v554
        %712 = vmatprep.subr.bf16.mxu0 0
        %713 = vmatpush1.bf16.msra.mxu0 %v555
        %714 = vmatprep.subr.bf16.mxu0 0
        %715 = vmatpush1.bf16.msra.mxu0 %v556
        %716 = vmatprep.subr.bf16.mxu0 0
        %717 = vmatpush1.bf16.msra.mxu0 %v557
        %718 = vmatprep.mubr.bf16.mxu0 %v214
        %719 = vmatmul.mubr.bf16.gmra.mrb[0].mxu0 %v213
        %v720 = vpop.f32.mrb[0].mxu0
        %v721 = vadd.f32 %v681, %v720
        %v722 = vpop.f32.mrb[0].mxu0
        %v723 = vpop.f32.mrb[0].mxu0
        %v724 = vpop.f32.mrb[0].mxu0
        %725 = vdwg.mxu0
        %v726 = vmax.f32 %v721, 0.0
        %v727 = vmul.f32 %v726, %v726
        %728 = vadd.xlane.f32.xlu0 %v727
        %v729 = vpop.xlane.xlu0 %728
        %v730 = vmax.f32 %v729, 1e-24
        %v731 = vrsqrt.pop %v730
        %v732 = vmul.f32 %v726, %v731
        %733 = vst [vmem:[%s201] sm:$0xff] %v732
        %s734 = sand.u32 %s97, 1
        %s735 = scalar_lea.sflag [#allocation4], %s734
        %s736 = sand.u32 %s97, 1
        %s737 = smul.addr %s736, 8
        %s738 = scalar_lea.vmem [#allocation7], %s737
        // Predicated region
        $region41: #{tpu_custom_call.1} parent=31 // pred_check
          %p739 = pneg %p107
        $region42: #{tpu_custom_call.1} parent=31 // pred_check_branch
          %741 = sbr.rel (%p739) target = $region44
        $region43: #{tpu_custom_call.1} parent=31 // pred_region
          %s743 = ssub.s32 128, 128
          %744 = vsyncadd %s735, %s743
          %s745 = smul.addr %s21, 128
          %s746 = scalar_lea.hbm %s3, %s745
          %s748 = sshll.u32 %s738, 4
          %s749 = int_to_ptr.vmem [resolvable:$true] %s748
          %751 = dma.vmem_to_hbm [thread:$0]  %s749, 128, %s746, %s735
        $region44: #{tpu_custom_call.1} parent=31 // pred_fallthru
          _
      $region32: #{tpu_custom_call.1} parent=5 // pred_fallthru
        _
      %p752 = scmp.le.s32.totalorder 2, %s16
      // Predicated region
      $region45: #{tpu_custom_call.1} parent=5 // pred_check
        %p753 = pneg %p752
      $region46: #{tpu_custom_call.1} parent=5 // pred_check_branch
        %755 = sbr.rel (%p753) target = $region48
      $region47: #{tpu_custom_call.1} parent=5 // pred_region
        %s756 = ssub.s32 %s16, 2
        // Predicated region
        $region49: #{tpu_custom_call.1} parent=47 // pred_check
          %p757 = pneg %p113
        $region50: #{tpu_custom_call.1} parent=47 // pred_check_branch
          %759 = sbr.rel (%p757) target = $region52
        $region51: #{tpu_custom_call.1} parent=47 // pred_region
          %s760 = sand.u32 %s98, 1
          %s761 = scalar_lea.sflag [#allocation4], %s760
          %s762 = sand.u32 %s98, 1
          %s763 = smul.addr %s762, 8
          %s764 = scalar_lea.vmem [#allocation7], %s763
          %765 = dma.done %s761, 128
        $region52: #{tpu_custom_call.1} parent=47 // pred_fallthru
          _
      $region48: #{tpu_custom_call.1} parent=5 // pred_fallthru
        _
    $region6: #{tpu_custom_call.1} parent=1 // loop_footer
      %s20 = sadd.s32 1, %s16
    $region7: #{tpu_custom_call.1} parent=1 // loop_footer_branch
      %15 = sbr.rel target = $region3
    $region8: #{tpu_custom_call.1} parent=1 // loop_exit
      _
    %766 = vsyncpa [#allocation3], 1
    %s767 = scalar_lea.sflag [#allocation3], 1
    %768 = vsyncpa %s767, 1
    %769 = vsyncpa [#allocation6], 1
    %770 = vsyncpa [#allocation4], 1
    %s771 = scalar_lea.sflag [#allocation4], 1
    %772 = vsyncpa %s771, 1

</llo_original>
